<compile_context>
chip_gen: v5e
topology: v5e:2x2
jax: 0.10.0
libtpu: 0.0.40
codegen_flags: <defaults>
</compile_context>

<pallas_src>
import jax
import jax.numpy as jnp
from jax.experimental import pallas as pl
from jax.experimental.pallas import tpu as pltpu


def _spatial_dropout_kernel(scale_ref, x_ref, o_ref):
    # scale_ref: (tm, 1) per-plane scale (0 or 1/keep_prob), same dtype as x.
    # Broadcasts across the (tm, tk) tile; pure VPU elementwise work.
    o_ref[...] = x_ref[...] * scale_ref[...]


def spatial_dropout(x, seed, drop_rate=0.5, training=True,
                    *, block_rows=256, block_cols=2048):
    assert x.ndim == 4, (
        "Expected input with 4 dimensions (bsize, channels, height, width)")
    if not training or drop_rate == 0.0:
        return x
    if drop_rate >= 1.0:
        return jnp.zeros_like(x)

    N, C, H, W = x.shape
    keep_prob = 1.0 - drop_rate
    NC, HW = N * C, H * W

    # Per-plane random decision computed outside the kernel (spatial dropout:
    # the whole (H, W) plane is either zeroed or scaled by 1/keep_prob).
    key = jax.random.PRNGKey(seed)
    keep = jax.random.bernoulli(key, p=keep_prob, shape=(NC, 1))
    scale2 = (keep.astype(jnp.float32) * (1.0 / keep_prob)).astype(x.dtype)

    # Lane-dense 2-D view: one row per (n, c) plane.  Row-major merge of
    # contiguous dims -> no data movement.
    x2 = x.reshape(NC, HW)

    # Block shape: either the full extent (always legal) or an (8,128)-aligned
    # tile.  block_rows/block_cols are (8,128)-multiples, and partial edge
    # blocks are masked by Pallas, so no padding copies are needed.
    tm = NC if NC <= block_rows else block_rows
    tk = HW if HW <= block_cols else block_cols
    grid = (pl.cdiv(NC, tm), pl.cdiv(HW, tk))

    out2 = pl.pallas_call(
        _spatial_dropout_kernel,
        out_shape=jax.ShapeDtypeStruct((NC, HW), x.dtype),
        grid_spec=pl.GridSpec(
            grid=grid,
            in_specs=[
                pl.BlockSpec((tm, 1), lambda i, j: (i, 0)),    # per-plane scale
                pl.BlockSpec((tm, tk), lambda i, j: (i, j)),   # input tile
            ],
            out_specs=pl.BlockSpec((tm, tk), lambda i, j: (i, j)),
        ),
        compiler_params=pltpu.CompilerParams(
            # Order-independent elementwise op: let both v7x TCs share the grid.
            dimension_semantics=("parallel", "parallel"),
            vmem_limit_bytes=32 * 1024 * 1024,
        ),
    )(scale2, x2)

    return out2.reshape(N, C, H, W)


def _check(x, out, keep_prob):
    import numpy as np
    x_np = np.asarray(jax.device_get(x))
    o_np = np.asarray(jax.device_get(out))
    inv = 1.0 / keep_prob
    for n in range(x_np.shape[0]):
        for c in range(x_np.shape[1]):
            plane = o_np[n, c]
            if np.all(plane == 0.0):
                continue
            np.testing.assert_allclose(plane, x_np[n, c] * inv, rtol=1e-6)


if __name__ == "__main__":
    key = jax.random.PRNGKey(0)

    # Main case: matches the module's expected 4-D (N, C, H, W) input.
    x = jax.random.normal(key, (2, 4, 16, 16), dtype=jnp.float32)
    out = spatial_dropout(x, seed=0, drop_rate=0.5, training=True)
    out = jax.block_until_ready(out)
    _check(x, out, keep_prob=0.5)

    # Second case with tiny block overrides to exercise the partial-edge-block
    # (masked) path of the tiling.
    x2 = jax.random.normal(jax.random.PRNGKey(1), (2, 20, 16, 16),
                           dtype=jnp.float32)
    out2 = spatial_dropout(x2, seed=3, drop_rate=0.5, training=True,
                           block_rows=16, block_cols=128)
    out2 = jax.block_until_ready(out2)
    _check(x2, out2, keep_prob=0.5)

    # Eval mode is the identity.
    out3 = jax.block_until_ready(
        spatial_dropout(x, seed=0, drop_rate=0.5, training=False))
    assert jnp.array_equal(out3, x)

    print("KERNEL_OK")
</pallas_src>

<mosaic_0001>
module attributes {stable_mosaic.version = 11 : i64} {
  func.func @_spatial_dropout_kernel(%arg0: i32, %arg1: i32, %arg2: memref<8x1xf32, #tpu.memory_space<vmem>>, %arg3: memref<8x256xf32, #tpu.memory_space<vmem>>, %arg4: memref<8x256xf32, #tpu.memory_space<vmem>>) attributes {dimension_semantics = [#tpu.dimension_semantics<parallel>, #tpu.dimension_semantics<parallel>], iteration_bounds = array<i64: 1, 1>, scalar_prefetch = 0 : i64, scratch_operands = 0 : i64, tpu.core_type = #tpu.core_type<tc>, window_params = [{transform_indices = @transform_0, window_bounds = array<i64: 8, 1>}, {transform_indices = @transform_1, window_bounds = array<i64: 8, 256>}, {transform_indices = @transform_2, window_bounds = array<i64: 8, 256>}]} {
    %c0 = arith.constant 0 : index
    %c0_0 = arith.constant 0 : index
    %0 = vector.load %arg3[%c0, %c0_0] : memref<8x256xf32, #tpu.memory_space<vmem>>, vector<8x256xf32>
    %c0_1 = arith.constant 0 : index
    %c0_2 = arith.constant 0 : index
    %1 = vector.load %arg2[%c0_1, %c0_2] : memref<8x1xf32, #tpu.memory_space<vmem>>, vector<8x1xf32>
    %2 = vector.broadcast %1 : vector<8x1xf32> to vector<8x256xf32>
    %3 = arith.mulf %0, %2 : vector<8x256xf32>
    %c0_3 = arith.constant 0 : index
    %c0_4 = arith.constant 0 : index
    %4 = vector.load %arg4[%c0_3, %c0_4] : memref<8x256xf32, #tpu.memory_space<vmem>>, vector<8x256xf32>
    tpu.vector_store %arg4[%c0_3, %c0_4], %3 {strides = array<i32>} : memref<8x256xf32, #tpu.memory_space<vmem>>, vector<8x256xf32>,
    return
  }
  func.func @transform_0(%arg0: i32, %arg1: i32) -> (i32, i32) {
    %c0_i32 = arith.constant 0 : i32
    %c0_i32_0 = arith.constant 0 : i32
    return %arg0, %c0_i32 : i32, i32
  }
  func.func @transform_1(%arg0: i32, %arg1: i32) -> (i32, i32) {
    %c0_i32 = arith.constant 0 : i32
    return %arg0, %arg1 : i32, i32
  }
  func.func @transform_2(%arg0: i32, %arg1: i32) -> (i32, i32) {
    %c0_i32 = arith.constant 0 : i32
    return %arg0, %arg1 : i32, i32
  }
}

</mosaic_0001>

<llo_original>
// kernel: tpu_custom_call.1
$region0: #{tpu_custom_call.1}
  #allocation0 [shape = 'u32[]', space=smem, size = 0x4, offset = 0x4, fixed_abs, tag = 'smem constant byte address 0x4 - core index']
  #allocation1 [shape = 'u32[72,128]{1,0:T(1,128)}', space=vmem, size = 0x9000, scoped, tag = 'internal scratch']
  %s0 = inlined_call_operand.vmem [shape: f32[8,1], index: 0, kind: input, shape index: {}]
  %s1 = inlined_call_operand.hbm [shape: f32[8,256], index: 1, kind: input, shape index: {}]
  %s2 = inlined_call_operand.hbm [shape: f32[8,256], index: 2, kind: output, shape index: {}]
  %s3 = sld [smem:[#allocation0]]
  $region22: #{tpu_custom_call.1} parent=0
    _
  %s5 = ssub.s32 1, %s3
  %s6 = scalar_select 0, %s5, %s3
  $region1: #{tpu_custom_call.1} parent=0
    #allocation2 [shape = 'u8[8192]{0}', space=vmem, size = 0x2000, scoped, tag = 'input window, operand 1, single buffered']
    #allocation3 [shape = 's32[1]{0}', space=sflag, size = 0x4, scoped, tag = 'scoped memory for tpu_custom_call.1']
    #allocation4 [shape = 's32[1]{0}', space=sflag, size = 0x4, scoped, tag = 'scoped memory for tpu_custom_call.1']
    #allocation5 [shape = 'u8[8192]{0}', space=vmem, size = 0x2000, scoped, tag = 'output window, operand 0, single buffered']
    %7 = vsyncpa [#allocation3], 0
    %8 = vsyncpa [#allocation4], 0
    // Predicated region
    $region2: #{tpu_custom_call.1} parent=1 // pred_check
      _
    $region3: #{tpu_custom_call.1} parent=1 // pred_check_branch
      %10 = sbr.rel (0) target = $region5
    $region4: #{tpu_custom_call.1} parent=1 // pred_region
      _
    $region5: #{tpu_custom_call.1} parent=1 // pred_fallthru
      _
    // Predicated region
    $region6: #{tpu_custom_call.1} parent=1 // pred_check
      _
    $region7: #{tpu_custom_call.1} parent=1 // pred_check_branch
      %12 = sbr.rel (0) target = $region9
    $region8: #{tpu_custom_call.1} parent=1 // pred_region
      %14 = vsyncadd [#allocation3], 0
      %s16 = sshll.u32 %s1, 4
      %s17 = int_to_ptr.hbm [resolvable:$true] %s16
      %s18 = sshll.u32 [#allocation2], 4
      %s19 = int_to_ptr.vmem [resolvable:$true] %s18
      %21 = dma.hbm_to_vmem [thread:$0]  %s17, 256, %s19, [#allocation3]
    $region9: #{tpu_custom_call.1} parent=1 // pred_fallthru
      _
    // Predicated region
    $region10: #{tpu_custom_call.1} parent=1 // pred_check
      _
    $region11: #{tpu_custom_call.1} parent=1 // pred_check_branch
      %23 = sbr.rel (0) target = $region13
    $region12: #{tpu_custom_call.1} parent=1 // pred_region
      %25 = dma.done [#allocation3], 256
    $region13: #{tpu_custom_call.1} parent=1 // pred_fallthru
      _
    %v26 = vld [vmem:[#allocation2] sm:$0xff]
    %v27 = vld [vmem:[#allocation2 + $0x8] sm:$0xff]
    %v28 = vld [vmem:[%s0] sm:$0xff]
    %30 = vset.pattern.permute.xlu0 0
    %31 = vperm.xlu0 %30, %v28
    %v32 = vpop.permute.xlu0 %31
    %v34 = vmul.f32 %v26, %v32
    %v35 = vmul.f32 %v27, %v32
    %36 = vst [vmem:[#allocation5] sm:$0xff] %v34
    %37 = vst [vmem:[#allocation5 + $0x8] sm:$0xff] %v35
    // Predicated region
    $region14: #{tpu_custom_call.1} parent=1 // pred_check
      _
    $region15: #{tpu_custom_call.1} parent=1 // pred_check_branch
      %39 = sbr.rel (0) target = $region17
    $region16: #{tpu_custom_call.1} parent=1 // pred_region
      %41 = vsyncadd [#allocation4], 0
      %s43 = sshll.u32 [#allocation5], 4
      %s44 = int_to_ptr.vmem [resolvable:$true] %s43
      %s45 = sshll.u32 %s2, 4
      %s46 = int_to_ptr.hbm [resolvable:$true] %s45
      %48 = dma.vmem_to_hbm [thread:$0]  %s44, 256, %s46, [#allocation4]
    $region17: #{tpu_custom_call.1} parent=1 // pred_fallthru
      _
    // Predicated region
    $region18: #{tpu_custom_call.1} parent=1 // pred_check
      _
    $region19: #{tpu_custom_call.1} parent=1 // pred_check_branch
      %50 = sbr.rel (0) target = $region21
    $region20: #{tpu_custom_call.1} parent=1 // pred_region
      %52 = dma.done [#allocation4], 256
    $region21: #{tpu_custom_call.1} parent=1 // pred_fallthru
      _
    %53 = vsyncpa [#allocation3], 1
    %54 = vsyncpa [#allocation4], 1

</llo_original>
